<compile_context>
chip_gen: v7x
topology: tpu7x:2x2x1
jax: 0.10.0
libtpu: 0.0.40
codegen_flags: <defaults>
</compile_context>

<pallas_src>
import functools
import math

import jax
import jax.numpy as jnp
from jax.experimental import pallas as pl
from jax.experimental.pallas import tpu as pltpu


_PI_REF = 3.14159265  # the constant used by the PyTorch reference


def _round_up(v, mult):
    return ((v + mult - 1) // mult) * mult


def _chebyshev_cos_m(c, m):
    # mlambda[m](cos_theta) from the reference module.
    if m == 0:
        return jnp.ones_like(c)
    if m == 1:
        return c
    if m == 2:
        return 2.0 * c * c - 1.0
    if m == 3:
        return 4.0 * c * c * c - 3.0 * c
    if m == 4:
        c2 = c * c
        return 8.0 * c2 * c2 - 8.0 * c2 + 1.0
    if m == 5:
        c2 = c * c
        return 16.0 * c2 * c2 * c - 20.0 * c2 * c + 5.0 * c
    raise ValueError("m must be in [0, 5]")


def _angle_linear_kernel(x_ref, w_ref, inv_wn_ref, label_ref, scale_ref, out_ref,
                         *, m, block_c):
    """One (batch-tile, class-tile) output block.

    x_ref      : (tB, D)  f32   (VMEM)
    w_ref      : (tC, D)  bf16/f32 (VMEM)  -- raw (un-normalized) weight rows
    inv_wn_ref : (1, tC)  f32   (VMEM)  -- 1 / max(||w_row||, 1e-12), precomputed
    label_ref  : (tB, 1)  i32   (VMEM)
    scale_ref  : (1, 1)   f32   (SMEM)  -- 1 / (1 + lamb), runtime scalar
    out_ref    : (tB, tC) f32   (VMEM)
    """
    cj = pl.program_id(0)  # class-tile index (outer grid axis)

    x = x_ref[...].astype(jnp.float32)                       # (tB, D)

    # Per-row feature norms (f32, matches torch.norm / F.normalize eps).  This is
    # only tB values -> negligible cost, so keep full-precision sqrt/divide.
    x_sumsq = jnp.sum(x * x, axis=1, keepdims=True)          # (tB, 1)
    x_norm = jnp.sqrt(x_sumsq)                               # NormOfFeature
    inv_x_norm = 1.0 / jnp.maximum(x_norm, 1e-12)

    # Raw matmul on the MXU: contract last dims of both operands (no transpose
    # materialization).  Operands in w_ref.dtype (bf16 by default), f32 accumulate.
    s = jax.lax.dot_general(
        x.astype(w_ref.dtype), w_ref[...],
        dimension_numbers=(((1,), (1,)), ((), ())),
        preferred_element_type=jnp.float32)                  # (tB, tC)

    # Fold both normalizations into the epilogue (2 broadcast muls) then clip.
    cos = jnp.clip(s * inv_x_norm * inv_wn_ref[...], -1.0, 1.0)

    # ---- margin branch: only for the label column of each row ----------------
    local = label_ref[...] - cj * block_c                    # (tB, 1) int32
    col = jax.lax.broadcasted_iota(jnp.int32, cos.shape, 1)  # (tB, tC)
    one_hot = col == local                                   # all-False row if the
                                                             # label is in another tile

    # cos_theta at the label column (0.0 when the label is outside this tile;
    # the correction is masked out below so that value is never used).
    cos_l = jnp.sum(jnp.where(one_hot, cos, 0.0), axis=1, keepdims=True)  # (tB, 1)

    # cos(m*theta) via Chebyshev polynomial, on the (tB, 1) vector only.
    cos_m_theta = _chebyshev_cos_m(cos_l, m)

    # k = floor(m * acos(cos)/pi) without acos: acos is monotone decreasing, so
    #   k >= j  <=>  cos <= cos(j*pi_ref/m)
    k = jnp.zeros_like(cos_l)
    for jj in range(1, m + 1):
        thr = jnp.float32(math.cos(jj * _PI_REF / m))
        k = k + jnp.where(cos_l <= thr, 1.0, 0.0)

    sign = 1.0 - 2.0 * jnp.mod(k, 2.0)                       # (-1)^k
    phi = sign * cos_m_theta - 2.0 * k                       # (tB, 1)

    # one_hot * (phi - cos) / (1 + lamb), applied only at the label column.
    corr = (phi - cos_l) * scale_ref[0, 0]                   # (tB, 1)

    out = (cos + jnp.where(one_hot, corr, 0.0)) * x_norm     # *= NormOfFeature
    out_ref[...] = out.astype(out_ref.dtype)


def angle_linear(x, weight, label, *, m=4, iteration=1,
                 base=1000.0, gamma=0.12, power=1, lambda_min=5.0,
                 block_b=None, block_c=None, matmul_dtype=jnp.bfloat16):
    """Forward pass of AngleLinear.  x:(B,D) f32, weight:(C,D), label:(B,) int."""
    B, D = x.shape
    C, D2 = weight.shape
    assert D == D2

    # lamb is a *runtime* value fed to the kernel through SMEM (no recompiles
    # when the iteration counter changes during training).
    lamb = jnp.maximum(
        jnp.float32(lambda_min),
        jnp.float32(base) * (1.0 + jnp.float32(gamma) * iteration) ** (-power))
    margin_scale = (1.0 / (1.0 + lamb)).reshape(1, 1).astype(jnp.float32)

    # Tile sizes: lane-dense output tiles (tC multiple of 128), tB multiple of 8.
    # Defaults keep the double-buffered VMEM footprint modest even on v7x (64 MiB).
    if block_b is None:
        block_b = min(_round_up(B, 8), 256)
    if block_c is None:
        block_c = min(_round_up(C, 128), 2048)
    assert block_b % 8 == 0 and block_c % 128 == 0

    Bp = _round_up(B, block_b)
    Cp = _round_up(C, block_c)

    # Hoisted once (plain JAX, tiny): inverse L2 norm of each weight row, f32,
    # same eps semantics as F.normalize.  EUP-style rsqrt instead of sqrt+divide.
    w_f32 = weight.astype(jnp.float32)
    inv_w_norm = jax.lax.rsqrt(
        jnp.maximum(jnp.sum(w_f32 * w_f32, axis=1), 1e-24)).reshape(1, C)

    # Pad to tile multiples (zero rows/classes produce zero output, sliced off).
    x_p = x.astype(jnp.float32)
    label_p = label.reshape(-1, 1).astype(jnp.int32)
    if Bp != B:
        x_p = jnp.pad(x_p, ((0, Bp - B), (0, 0)))
        label_p = jnp.pad(label_p, ((0, Bp - B), (0, 0)))
    w_p = weight.astype(matmul_dtype)       # bf16 weight -> half the HBM traffic
    inv_wn_p = inv_w_norm
    if Cp != C:
        w_p = jnp.pad(w_p, ((0, Cp - C), (0, 0)))
        inv_wn_p = jnp.pad(inv_w_norm, ((0, 0), (0, Cp - C)))

    n_c = Cp // block_c
    n_b = Bp // block_b

    kernel = functools.partial(_angle_linear_kernel, m=m, block_c=block_c)

    grid_spec = pltpu.PrefetchScalarGridSpec(
        num_scalar_prefetch=0,
        grid=(n_c, n_b),  # class tiles outer -> each weight tile DMA'd once
        in_specs=[
            pl.BlockSpec((block_b, D), lambda c, b: (b, 0)),        # x
            pl.BlockSpec((block_c, D), lambda c, b: (c, 0)),        # weight (bf16)
            pl.BlockSpec((1, block_c), lambda c, b: (0, c)),        # inv ||w||
            pl.BlockSpec((block_b, 1), lambda c, b: (b, 0)),        # labels
            pl.BlockSpec(memory_space=pltpu.MemorySpace.SMEM),      # 1/(1+lamb)
        ],
        out_specs=pl.BlockSpec((block_b, block_c), lambda c, b: (b, c)),
    )

    out = pl.pallas_call(
        kernel,
        out_shape=jax.ShapeDtypeStruct((Bp, Cp), jnp.float32),
        grid_spec=grid_spec,
        compiler_params=pltpu.CompilerParams(
            dimension_semantics=("parallel", "parallel")),
    )(x_p, w_p, inv_wn_p, label_p, margin_scale)

    if Bp != B or Cp != C:
        out = out[:B, :C]
    return out


def xavier_uniform(key, out_features, in_features):
    a = math.sqrt(6.0 / (in_features + out_features))
    return jax.random.uniform(key, (out_features, in_features),
                              dtype=jnp.float32, minval=-a, maxval=a)


if __name__ == "__main__":
    B, D, C, M = 16, 128, 256, 4   # small demo shapes; forces a (2, 2) grid below

    key = jax.random.PRNGKey(0)
    kx, kw, kl = jax.random.split(key, 3)

    x = jax.random.normal(kx, (B, D), dtype=jnp.float32)
    weight = xavier_uniform(kw, C, D)
    label = jax.random.randint(kl, (B,), 0, C, dtype=jnp.int32)

    # f32 MXU operands: tight numerical check against the faithful reference.
    out_f32 = angle_linear(x, weight, label, m=M, iteration=1,
                           block_b=8, block_c=128, matmul_dtype=jnp.float32)
    jax.block_until_ready(out_f32)

    # Default bf16 MXU operands (2x MXU throughput / half weight DMA): small,
    # bounded accuracy delta on cos_theta -> looser tolerance.
    out_bf16 = angle_linear(x, weight, label, m=M, iteration=1,
                            block_b=8, block_c=128)
    jax.block_until_ready(out_bf16)

    # Pure-JAX reference (same math as the PyTorch forward).
    lamb = max(5.0, 1000.0 * (1.0 + 0.12 * 1) ** (-1))
    xn = x / jnp.maximum(jnp.linalg.norm(x, axis=1, keepdims=True), 1e-12)
    wn = weight / jnp.maximum(jnp.linalg.norm(weight, axis=1, keepdims=True), 1e-12)
    cos = jnp.clip(xn @ wn.T, -1.0, 1.0)
    cos_m = 8 * cos ** 4 - 8 * cos ** 2 + 1
    theta = jnp.arccos(cos)
    k = jnp.floor(M * theta / 3.14159265)
    phi = (-1.0) ** k * cos_m - 2 * k
    one_hot = jax.nn.one_hot(label, C, dtype=jnp.float32)
    ref = one_hot * (phi - cos) / (1 + lamb) + cos
    ref = ref * jnp.linalg.norm(x, axis=1, keepdims=True)

    err_f32 = float(jnp.max(jnp.abs(out_f32 - ref)))
    err_bf16 = float(jnp.max(jnp.abs(out_bf16 - ref)))
    assert jnp.allclose(out_f32, ref, atol=3e-3, rtol=3e-3), err_f32
    assert jnp.allclose(out_bf16, ref, atol=2e-1, rtol=0.0), err_bf16
    print("KERNEL_OK")
</pallas_src>

<mosaic_0001>
module attributes {stable_mosaic.version = 11 : i64} {
  func.func @_angle_linear_kernel(%arg0: i32, %arg1: i32, %arg2: memref<8x128xf32, #tpu.memory_space<vmem>>, %arg3: memref<128x128xf32, #tpu.memory_space<vmem>>, %arg4: memref<1x128xf32, #tpu.memory_space<vmem>>, %arg5: memref<8x1xi32, #tpu.memory_space<vmem>>, %arg6: memref<1x1xf32, #tpu.memory_space<smem>>, %arg7: memref<8x128xf32, #tpu.memory_space<vmem>>) attributes {dimension_semantics = [#tpu.dimension_semantics<parallel>, #tpu.dimension_semantics<parallel>], iteration_bounds = array<i64: 2, 2>, scalar_prefetch = 0 : i64, scratch_operands = 0 : i64, tpu.core_type = #tpu.core_type<tc>, window_params = [{transform_indices = @transform_0, window_bounds = array<i64: 8, 128>}, {transform_indices = @transform_1, window_bounds = array<i64: 128, 128>}, {transform_indices = @transform_2, window_bounds = array<i64: 1, 128>}, {transform_indices = @transform_3, window_bounds = array<i64: 8, 1>}, {transform_indices = @transform_4, window_bounds = array<i64: 1, 1>}, {transform_indices = @transform_5, window_bounds = array<i64: 8, 128>}]} {
    %c0 = arith.constant 0 : index
    %c0_0 = arith.constant 0 : index
    %0 = vector.load %arg2[%c0, %c0_0] : memref<8x128xf32, #tpu.memory_space<vmem>>, vector<8x128xf32>
    %1 = arith.mulf %0, %0 : vector<8x128xf32>
    %cst = arith.constant dense<0.000000e+00> : vector<8xf32>
    %2 = vector.multi_reduction <add>, %1, %cst [1] : vector<8x128xf32> to vector<8xf32>
    %3 = vector.shape_cast %2 : vector<8xf32> to vector<8x1xf32>
    %4 = math.sqrt %3 : vector<8x1xf32>
    %cst_1 = arith.constant 9.99999996E-13 : f32
    %5 = vector.broadcast %cst_1 : f32 to vector<8x1xf32>
    %6 = arith.maximumf %4, %5 : vector<8x1xf32>
    %cst_2 = arith.constant 1.000000e+00 : f32
    %7 = vector.broadcast %cst_2 : f32 to vector<8x1xf32>
    %8 = arith.divf %7, %6 : vector<8x1xf32>
    %c0_3 = arith.constant 0 : index
    %c0_4 = arith.constant 0 : index
    %9 = vector.load %arg3[%c0_3, %c0_4] : memref<128x128xf32, #tpu.memory_space<vmem>>, vector<128x128xf32>
    %cst_5 = arith.constant dense<0.000000e+00> : vector<8x128xf32>
    %10 = tpu.matmul %0, %9, %cst_5 {dimension_numbers = #tpu.dot_dimension_numbers<[1], [1], [0], [0], [0, 0, 1, 0], [], []>} : vector<8x128xf32>, vector<128x128xf32>, vector<8x128xf32> -> vector<8x128xf32>
    %11 = vector.broadcast %8 : vector<8x1xf32> to vector<8x128xf32>
    %12 = arith.mulf %10, %11 : vector<8x128xf32>
    %c0_6 = arith.constant 0 : index
    %c0_7 = arith.constant 0 : index
    %13 = vector.load %arg4[%c0_6, %c0_7] : memref<1x128xf32, #tpu.memory_space<vmem>>, vector<1x128xf32>
    %14 = vector.broadcast %13 : vector<1x128xf32> to vector<8x128xf32>
    %15 = arith.mulf %12, %14 : vector<8x128xf32>
    %cst_8 = arith.constant -1.000000e+00 : f32
    %cst_9 = arith.constant 1.000000e+00 : f32
    %16 = vector.broadcast %cst_8 : f32 to vector<8x128xf32>
    %17 = arith.maximumf %16, %15 : vector<8x128xf32>
    %18 = vector.broadcast %cst_9 : f32 to vector<8x128xf32>
    %19 = arith.minimumf %18, %17 : vector<8x128xf32>
    %c0_10 = arith.constant 0 : index
    %c0_11 = arith.constant 0 : index
    %20 = vector.load %arg5[%c0_10, %c0_11] : memref<8x1xi32, #tpu.memory_space<vmem>>, vector<8x1xi32>
    %c128_i32 = arith.constant 128 : i32
    %21 = arith.muli %arg0, %c128_i32 : i32
    %22 = vector.broadcast %21 : i32 to vector<8x1xi32>
    %23 = arith.subi %20, %22 : vector<8x1xi32>
    %24 = tpu.iota {dimensions = array<i32: 1>} : vector<8x128xi32>
    %25 = vector.broadcast %23 : vector<8x1xi32> to vector<8x128xi32>
    %26 = arith.cmpi eq, %24, %25 : vector<8x128xi32>
    %cst_12 = arith.constant 0.000000e+00 : f32
    %27 = vector.broadcast %cst_12 : f32 to vector<8x128xf32>
    %28 = arith.select %26, %19, %27 : vector<8x128xi1>, vector<8x128xf32>
    %cst_13 = arith.constant dense<0.000000e+00> : vector<8xf32>
    %29 = vector.multi_reduction <add>, %28, %cst_13 [1] : vector<8x128xf32> to vector<8xf32>
    %30 = vector.shape_cast %29 : vector<8xf32> to vector<8x1xf32>
    %31 = arith.mulf %30, %30 : vector<8x1xf32>
    %cst_14 = arith.constant 8.000000e+00 : f32
    %32 = vector.broadcast %cst_14 : f32 to vector<8x1xf32>
    %33 = arith.mulf %32, %31 : vector<8x1xf32>
    %34 = arith.mulf %33, %31 : vector<8x1xf32>
    %cst_15 = arith.constant 8.000000e+00 : f32
    %35 = vector.broadcast %cst_15 : f32 to vector<8x1xf32>
    %36 = arith.mulf %35, %31 : vector<8x1xf32>
    %37 = arith.subf %34, %36 : vector<8x1xf32>
    %cst_16 = arith.constant 1.000000e+00 : f32
    %38 = vector.broadcast %cst_16 : f32 to vector<8x1xf32>
    %39 = arith.addf %37, %38 : vector<8x1xf32>
    %cst_17 = arith.constant 0.000000e+00 : f32
    %40 = vector.broadcast %cst_17 : f32 to vector<8x1xf32>
    %cst_18 = arith.constant 0.707106769 : f32
    %41 = vector.broadcast %cst_18 : f32 to vector<8x1xf32>
    %42 = arith.cmpf ole, %30, %41 : vector<8x1xf32>
    %cst_19 = arith.constant 1.000000e+00 : f32
    %cst_20 = arith.constant 0.000000e+00 : f32
    %43 = vector.broadcast %cst_19 : f32 to vector<8x1xf32>
    %44 = vector.broadcast %cst_20 : f32 to vector<8x1xf32>
    %45 = arith.select %42, %43, %44 : vector<8x1xi1>, vector<8x1xf32>
    %46 = arith.addf %40, %45 : vector<8x1xf32>
    %cst_21 = arith.constant 1.79489656E-9 : f32
    %47 = vector.broadcast %cst_21 : f32 to vector<8x1xf32>
    %48 = arith.cmpf ole, %30, %47 : vector<8x1xf32>
    %cst_22 = arith.constant 1.000000e+00 : f32
    %cst_23 = arith.constant 0.000000e+00 : f32
    %49 = vector.broadcast %cst_22 : f32 to vector<8x1xf32>
    %50 = vector.broadcast %cst_23 : f32 to vector<8x1xf32>
    %51 = arith.select %48, %49, %50 : vector<8x1xi1>, vector<8x1xf32>
    %52 = arith.addf %46, %51 : vector<8x1xf32>
    %cst_24 = arith.constant -0.707106769 : f32
    %53 = vector.broadcast %cst_24 : f32 to vector<8x1xf32>
    %54 = arith.cmpf ole, %30, %53 : vector<8x1xf32>
    %cst_25 = arith.constant 1.000000e+00 : f32
    %cst_26 = arith.constant 0.000000e+00 : f32
    %55 = vector.broadcast %cst_25 : f32 to vector<8x1xf32>
    %56 = vector.broadcast %cst_26 : f32 to vector<8x1xf32>
    %57 = arith.select %54, %55, %56 : vector<8x1xi1>, vector<8x1xf32>
    %58 = arith.addf %52, %57 : vector<8x1xf32>
    %cst_27 = arith.constant -1.000000e+00 : f32
    %59 = vector.broadcast %cst_27 : f32 to vector<8x1xf32>
    %60 = arith.cmpf ole, %30, %59 : vector<8x1xf32>
    %cst_28 = arith.constant 1.000000e+00 : f32
    %cst_29 = arith.constant 0.000000e+00 : f32
    %61 = vector.broadcast %cst_28 : f32 to vector<8x1xf32>
    %62 = vector.broadcast %cst_29 : f32 to vector<8x1xf32>
    %63 = arith.select %60, %61, %62 : vector<8x1xi1>, vector<8x1xf32>
    %64 = arith.addf %58, %63 : vector<8x1xf32>
    %cst_30 = arith.constant 2.000000e+00 : f32
    %65 = vector.broadcast %cst_30 : f32 to vector<8x1xf32>
    %66 = arith.remf %64, %65 : vector<8x1xf32>
    %cst_31 = arith.constant 0.000000e+00 : f32
    %67 = vector.broadcast %cst_31 : f32 to vector<8x1xf32>
    %68 = arith.cmpf one, %66, %67 : vector<8x1xf32>
    %cst_32 = arith.constant 0.000000e+00 : f32
    %69 = vector.broadcast %cst_32 : f32 to vector<8x1xf32>
    %70 = arith.cmpf olt, %66, %69 : vector<8x1xf32>
    %cst_33 = arith.constant 0.000000e+00 : f32
    %71 = arith.cmpf olt, %cst_30, %cst_33 : f32
    %72 = vector.broadcast %71 : i1 to vector<8x1xi1>
    %73 = vector.broadcast %72 : vector<8x1xi1> to vector<8x1xi1>
    %74 = arith.xori %70, %73 : vector<8x1xi1>
    %75 = arith.andi %74, %68 : vector<8x1xi1>
    %76 = vector.broadcast %cst_30 : f32 to vector<8x1xf32>
    %77 = arith.addf %66, %76 : vector<8x1xf32>
    %78 = arith.select %75, %77, %66 : vector<8x1xi1>, vector<8x1xf32>
    %cst_34 = arith.constant 2.000000e+00 : f32
    %79 = vector.broadcast %cst_34 : f32 to vector<8x1xf32>
    %80 = arith.mulf %79, %78 : vector<8x1xf32>
    %cst_35 = arith.constant 1.000000e+00 : f32
    %81 = vector.broadcast %cst_35 : f32 to vector<8x1xf32>
    %82 = arith.subf %81, %80 : vector<8x1xf32>
    %83 = arith.mulf %82, %39 : vector<8x1xf32>
    %cst_36 = arith.constant 2.000000e+00 : f32
    %84 = vector.broadcast %cst_36 : f32 to vector<8x1xf32>
    %85 = arith.mulf %84, %64 : vector<8x1xf32>
    %86 = arith.subf %83, %85 : vector<8x1xf32>
    %87 = arith.subf %86, %30 : vector<8x1xf32>
    %c0_37 = arith.constant 0 : index
    %c0_38 = arith.constant 0 : index
    %88 = memref.load %arg6[%c0_37, %c0_38] : memref<1x1xf32, #tpu.memory_space<smem>>
    %89 = vector.broadcast %88 : f32 to vector<8x1xf32>
    %90 = arith.mulf %87, %89 : vector<8x1xf32>
    %cst_39 = arith.constant 0.000000e+00 : f32
    %91 = vector.shape_cast %90 : vector<8x1xf32> to vector<8x1xf32>
    %92 = vector.broadcast %91 : vector<8x1xf32> to vector<8x128xf32>
    %93 = vector.broadcast %cst_39 : f32 to vector<8x128xf32>
    %94 = arith.select %26, %92, %93 : vector<8x128xi1>, vector<8x128xf32>
    %95 = arith.addf %19, %94 : vector<8x128xf32>
    %96 = vector.broadcast %4 : vector<8x1xf32> to vector<8x128xf32>
    %97 = arith.mulf %95, %96 : vector<8x128xf32>
    %c0_40 = arith.constant 0 : index
    %c0_41 = arith.constant 0 : index
    %98 = vector.load %arg7[%c0_40, %c0_41] : memref<8x128xf32, #tpu.memory_space<vmem>>, vector<8x128xf32>
    tpu.vector_store %arg7[%c0_40, %c0_41], %97 {strides = array<i32>} : memref<8x128xf32, #tpu.memory_space<vmem>>, vector<8x128xf32>,
    return
  }
  func.func @transform_0(%arg0: i32, %arg1: i32) -> (i32, i32) {
    %c0_i32 = arith.constant 0 : i32
    %c0_i32_0 = arith.constant 0 : i32
    return %arg1, %c0_i32 : i32, i32
  }
  func.func @transform_1(%arg0: i32, %arg1: i32) -> (i32, i32) {
    %c0_i32 = arith.constant 0 : i32
    %c0_i32_0 = arith.constant 0 : i32
    return %arg0, %c0_i32 : i32, i32
  }
  func.func @transform_2(%arg0: i32, %arg1: i32) -> (i32, i32) {
    %c0_i32 = arith.constant 0 : i32
    %c0_i32_0 = arith.constant 0 : i32
    return %c0_i32, %arg0 : i32, i32
  }
  func.func @transform_3(%arg0: i32, %arg1: i32) -> (i32, i32) {
    %c0_i32 = arith.constant 0 : i32
    %c0_i32_0 = arith.constant 0 : i32
    return %arg1, %c0_i32 : i32, i32
  }
  func.func @transform_4(%arg0: i32, %arg1: i32) -> (i32, i32) {
    %c0_i32 = arith.constant 0 : i32
    %c0_i32_0 = arith.constant 0 : i32
    %c0_i32_1 = arith.constant 0 : i32
    return %c0_i32, %c0_i32_0 : i32, i32
  }
  func.func @transform_5(%arg0: i32, %arg1: i32) -> (i32, i32) {
    %c0_i32 = arith.constant 0 : i32
    return %arg1, %arg0 : i32, i32
  }
}

</mosaic_0001>

<llo_original>
// kernel: tpu_custom_call.1
$region0: #{tpu_custom_call.1}
  #allocation0 [shape = 'u32[]', space=smem, size = 0x4, offset = 0x4, fixed_abs, tag = 'smem constant byte address 0x4 - core index']
  #allocation1 [shape = 'u32[144,128]{1,0:T(1,128)}', space=vmem, size = 0x12000, scoped, tag = 'internal scratch']
  #allocation2 [shape = 'f32[1,1]{1,0:T(1,128)S(6)}', space=smem, size = 0x200, scoped, tag = 'scoped memory for tpu_custom_call.1']
  %s0 = inlined_call_operand.vmem [shape: f32[16,128], index: 0, kind: input, shape index: {}]
  %s1 = inlined_call_operand.hbm [shape: f32[256,128], index: 1, kind: input, shape index: {}]
  %s2 = inlined_call_operand.vmem [shape: f32[1,256], index: 2, kind: input, shape index: {}]
  %s3 = inlined_call_operand.vmem [shape: s32[16,1], index: 3, kind: input, shape index: {}]
  %s4 = inlined_call_operand.<no memory space> [shape: f32[1,1], index: 4, kind: input, shape index: {}]
  %s5 = inlined_call_operand.hbm [shape: f32[16,256], index: 5, kind: output, shape index: {}]
  %s6 = sld [smem:[#allocation0]]
  $region57: #{tpu_custom_call.1} parent=0
    _
  %s8 = ssub.s32 1, %s6
  %s9 = scalar_select 0, %s8, %s6
  %10 = sst [smem:[#allocation2]] %s4
  $region1: #{tpu_custom_call.1} parent=0
    #allocation3 [shape = 'u8[131072]{0}', space=vmem, size = 0x20000, scoped, tag = 'input window, operand 1']
    #allocation4 [shape = 's32[2]{0}', space=sflag, size = 0x8, scoped, tag = 'scoped memory for tpu_custom_call.1']
    #allocation5 [shape = 's32[2]{0}', space=sflag, size = 0x8, scoped, tag = 'scoped memory for tpu_custom_call.1']
    #allocation6 [shape = 'u8[8192]{0}', space=vmem, size = 0x2000, scoped, tag = 'output window, operand 0']
    %11 = vsyncpa [#allocation4], 0
    %s12 = scalar_lea.sflag [#allocation4], 1
    %13 = vsyncpa %s12, 0
    %14 = vsyncpa [#allocation5], 0
    %s15 = scalar_lea.sflag [#allocation5], 1
    %16 = vsyncpa %s15, 0
    loop: start=0, step=1, limit=6
    $region2: #{tpu_custom_call.1} parent=1 // loop_pre_header
      _
    $region3: #{tpu_custom_call.1} parent=1 // loop_header
      %s18 = sphi 0, %s22
      %p19 = scmp.ge.s32.totalorder %s18, 6
      %s25 = sphi 0, %s37
      %s26 = sphi 0, %s33
      %s27 = sphi 0, %s25
      %s28 = sphi 0, %s26
      %s29 = sphi 0, %s27
      %s30 = sphi 0, %s28
      %s40 = sphi 0, %s42
      %s43 = sphi 0, %s40
      %s44 = sphi 0, %s43
      %s60 = sphi 0, %s44
      %s66 = sphi 0, %s68
      %s69 = sphi 0, %s66
      %s70 = sphi 0, %s69
      %s86 = sphi 0, %s70
      %s92 = sphi 0, %s94
      %s95 = sphi 0, %s92
      %s96 = sphi 0, %s95
      %s112 = sphi 0, %s96
      %s118 = sphi 0, %s120
      %s121 = sphi 0, %s118
      %s122 = sphi 0, %s121
      %s138 = sphi 0, %s122
      %s142 = sphi 0, %s142
      %s144 = sphi 0, %s142
      %s145 = sphi 0, %s144
      %s159 = sphi 0, %s145
      %s167 = sphi 0, %s169
      %s170 = sphi 0, %s167
      %s171 = sphi 0, %s170
      %s187 = sphi 0, %s171
    $region4: #{tpu_custom_call.1} parent=1 // loop_header_branch
      %21 = sbr.rel (%p19) target = $region8
    $region5: #{tpu_custom_call.1} parent=1 // loop_body
      %s23 = ssub.s32 %s18, 1
      %s24 = ssub.s32 %s18, 2
      %s31 = sadd.s32 1, %s26
      %p32 = scmp.ge.s32.totalorder %s31, 2
      %s33 = scalar_select %p32, 0, %s31
      %s34 = sadd.s32 1, %s25
      %s35 = scalar_select %p32, %s34, %s25
      %p36 = scmp.ge.s32.totalorder %s35, 2
      %s37 = scalar_select %p36, 0, %s35
      %s38 = ssub.s32 %s26, %s33
      %p39 = scmp.eq.s32.totalorder %s38, 0
      %s41 = sadd.s32 %s40, 1
      %s42 = scalar_select %p39, %s40, %s41
      %p45 = pneg %p39
      %p46 = scmp.eq.s32.totalorder %s18, 3
      %p47 = por %p45, %p46
      %p48 = scmp.ne.s32.totalorder %s40, %s43
      %p49 = scmp.eq.s32.totalorder %s18, 0
      %p50 = por %p48, %p49
      %p51 = scmp.ne.s32.totalorder %s40, %s43
      %p52 = scmp.eq.s32.totalorder %s23, 3
      %p53 = por %p51, %p52
      %p54 = scmp.ne.s32.totalorder %s43, %s44
      %p55 = scmp.eq.s32.totalorder %s23, 0
      %p56 = por %p54, %p55
      %p57 = scmp.ne.s32.totalorder %s43, %s44
      %p58 = scmp.eq.s32.totalorder %s24, 3
      %p59 = por %p57, %p58
      %p61 = scmp.ne.s32.totalorder %s44, %s60
      %p62 = scmp.eq.s32.totalorder %s24, 0
      %p63 = por %p61, %p62
      %s64 = ssub.s32 %s25, %s37
      %p65 = scmp.eq.s32.totalorder %s64, 0
      %s67 = sadd.s32 %s66, 1
      %s68 = scalar_select %p65, %s66, %s67
      %p71 = pneg %p65
      %p72 = scmp.eq.s32.totalorder %s18, 3
      %p73 = por %p71, %p72
      %p74 = scmp.ne.s32.totalorder %s66, %s69
      %p75 = scmp.eq.s32.totalorder %s18, 0
      %p76 = por %p74, %p75
      %p77 = scmp.ne.s32.totalorder %s66, %s69
      %p78 = scmp.eq.s32.totalorder %s23, 3
      %p79 = por %p77, %p78
      %p80 = scmp.ne.s32.totalorder %s69, %s70
      %p81 = scmp.eq.s32.totalorder %s23, 0
      %p82 = por %p80, %p81
      %p83 = scmp.ne.s32.totalorder %s69, %s70
      %p84 = scmp.eq.s32.totalorder %s24, 3
      %p85 = por %p83, %p84
      %p87 = scmp.ne.s32.totalorder %s70, %s86
      %p88 = scmp.eq.s32.totalorder %s24, 0
      %p89 = por %p87, %p88
      %s90 = ssub.s32 %s25, %s37
      %p91 = scmp.eq.s32.totalorder %s90, 0
      %s93 = sadd.s32 %s92, 1
      %s94 = scalar_select %p91, %s92, %s93
      %p97 = pneg %p91
      %p98 = scmp.eq.s32.totalorder %s18, 3
      %p99 = por %p97, %p98
      %p100 = scmp.ne.s32.totalorder %s92, %s95
      %p101 = scmp.eq.s32.totalorder %s18, 0
      %p102 = por %p100, %p101
      %p103 = scmp.ne.s32.totalorder %s92, %s95
      %p104 = scmp.eq.s32.totalorder %s23, 3
      %p105 = por %p103, %p104
      %p106 = scmp.ne.s32.totalorder %s95, %s96
      %p107 = scmp.eq.s32.totalorder %s23, 0
      %p108 = por %p106, %p107
      %p109 = scmp.ne.s32.totalorder %s95, %s96
      %p110 = scmp.eq.s32.totalorder %s24, 3
      %p111 = por %p109, %p110
      %p113 = scmp.ne.s32.totalorder %s96, %s112
      %p114 = scmp.eq.s32.totalorder %s24, 0
      %p115 = por %p113, %p114
      %s116 = ssub.s32 %s26, %s33
      %p117 = scmp.eq.s32.totalorder %s116, 0
      %s119 = sadd.s32 %s118, 1
      %s120 = scalar_select %p117, %s118, %s119
      %p123 = pneg %p117
      %p124 = scmp.eq.s32.totalorder %s18, 3
      %p125 = por %p123, %p124
      %p126 = scmp.ne.s32.totalorder %s118, %s121
      %p127 = scmp.eq.s32.totalorder %s18, 0
      %p128 = por %p126, %p127
      %p129 = scmp.ne.s32.totalorder %s118, %s121
      %p130 = scmp.eq.s32.totalorder %s23, 3
      %p131 = por %p129, %p130
      %p132 = scmp.ne.s32.totalorder %s121, %s122
      %p133 = scmp.eq.s32.totalorder %s23, 0
      %p134 = por %p132, %p133
      %p135 = scmp.ne.s32.totalorder %s121, %s122
      %p136 = scmp.eq.s32.totalorder %s24, 3
      %p137 = por %p135, %p136
      %p139 = scmp.ne.s32.totalorder %s122, %s138
      %p140 = scmp.eq.s32.totalorder %s24, 0
      %p141 = por %p139, %p140
      %s143 = sadd.s32 %s142, 1
      %p146 = scmp.eq.s32.totalorder %s18, 3
      %p147 = scmp.ne.s32.totalorder %s142, %s144
      %p148 = scmp.eq.s32.totalorder %s18, 0
      %p149 = por %p147, %p148
      %p150 = scmp.ne.s32.totalorder %s142, %s144
      %p151 = scmp.eq.s32.totalorder %s23, 3
      %p152 = por %p150, %p151
      %p153 = scmp.ne.s32.totalorder %s144, %s145
      %p154 = scmp.eq.s32.totalorder %s23, 0
      %p155 = por %p153, %p154
      %p156 = scmp.ne.s32.totalorder %s144, %s145
      %p157 = scmp.eq.s32.totalorder %s24, 3
      %p158 = por %p156, %p157
      %p160 = scmp.ne.s32.totalorder %s145, %s159
      %p161 = scmp.eq.s32.totalorder %s24, 0
      %p162 = por %p160, %p161
      %s163 = ssub.s32 %s26, %s33
      %s164 = ssub.s32 %s25, %s37
      %s165 = sor.u32 %s163, %s164
      %p166 = scmp.eq.s32.totalorder %s165, 0
      %s168 = sadd.s32 %s167, 1
      %s169 = scalar_select %p166, %s167, %s168
      %p172 = pneg %p166
      %p173 = scmp.eq.s32.totalorder %s18, 3
      %p174 = por %p172, %p173
      %p175 = scmp.ne.s32.totalorder %s167, %s170
      %p176 = scmp.eq.s32.totalorder %s18, 0
      %p177 = por %p175, %p176
      %p178 = scmp.ne.s32.totalorder %s167, %s170
      %p179 = scmp.eq.s32.totalorder %s23, 3
      %p180 = por %p178, %p179
      %p181 = scmp.ne.s32.totalorder %s170, %s171
      %p182 = scmp.eq.s32.totalorder %s23, 0
      %p183 = por %p181, %p182
      %p184 = scmp.ne.s32.totalorder %s170, %s171
      %p185 = scmp.eq.s32.totalorder %s24, 3
      %p186 = por %p184, %p185
      %p188 = scmp.ne.s32.totalorder %s171, %s187
      %p189 = scmp.eq.s32.totalorder %s24, 0
      %p190 = por %p188, %p189
      %p191 = scmp.le.s32.totalorder 1, %s18
      %p192 = scmp.lt.s32.totalorder %s18, 5
      %p193 = pnand %p191, %p192
      %p194 = pneg %p193
      // Predicated region
      $region9: #{tpu_custom_call.1} parent=5 // pred_check
        _
      $region10: #{tpu_custom_call.1} parent=5 // pred_check_branch
        %196 = sbr.rel (%p193) target = $region12
      $region11: #{tpu_custom_call.1} parent=5 // pred_region
        %s197 = ssub.s32 %s18, 1
        // Predicated region
        $region13: #{tpu_custom_call.1} parent=11 // pred_check
          %p198 = pneg %p155
        $region14: #{tpu_custom_call.1} parent=11 // pred_check_branch
          %200 = sbr.rel (%p198) target = $region16
        $region15: #{tpu_custom_call.1} parent=11 // pred_region
          _
        $region16: #{tpu_custom_call.1} parent=11 // pred_fallthru
          _
      $region12: #{tpu_custom_call.1} parent=5 // pred_fallthru
        _
      %p201 = scmp.lt.s32.totalorder %s18, 4
      // Predicated region
      $region17: #{tpu_custom_call.1} parent=5 // pred_check
        %p202 = pneg %p201
      $region18: #{tpu_custom_call.1} parent=5 // pred_check_branch
        %204 = sbr.rel (%p202) target = $region20
      $region19: #{tpu_custom_call.1} parent=5 // pred_region
        // Predicated region
        $region21: #{tpu_custom_call.1} parent=19 // pred_check
          %p205 = pneg %p50
        $region22: #{tpu_custom_call.1} parent=19 // pred_check_branch
          %207 = sbr.rel (%p205) target = $region24
        $region23: #{tpu_custom_call.1} parent=19 // pred_region
          %p208 = scmp.lt.s32.totalorder %s26, 1
          %s209 = scalar_select %p208, %s26, 1
          %s210 = smul.addr %s209, 8
          %s211 = scalar_lea.vmem %s0, %s210
        $region24: #{tpu_custom_call.1} parent=19 // pred_fallthru
          _
        // Predicated region
        $region25: #{tpu_custom_call.1} parent=19 // pred_check
          %p212 = pneg %p76
        $region26: #{tpu_custom_call.1} parent=19 // pred_check_branch
          %214 = sbr.rel (%p212) target = $region28
        $region27: #{tpu_custom_call.1} parent=19 // pred_region
          %s215 = sand.u32 %s66, 1
          %s216 = scalar_lea.sflag [#allocation4], %s215
          %s217 = sand.u32 %s66, 1
          %s218 = smul.addr %s217, 128
          %s219 = scalar_lea.vmem [#allocation3], %s218
          %s220 = smul.u32 16, %s25
          %s222 = ssub.s32 2048, 2048
          %223 = vsyncadd %s216, %s222
          %s224 = smul.addr %s220, 128
          %s225 = scalar_lea.hbm %s1, %s224
          %s226 = sshll.u32 %s219, 4
          %s227 = int_to_ptr.vmem [resolvable:$true] %s226
          %232 = dma.hbm_to_vmem [thread:$0]  %s225, 2048, %s227, %s216, 128, 128, 8
        $region28: #{tpu_custom_call.1} parent=19 // pred_fallthru
          _
        // Predicated region
        $region29: #{tpu_custom_call.1} parent=19 // pred_check
          %p233 = pneg %p102
        $region30: #{tpu_custom_call.1} parent=19 // pred_check_branch
          %235 = sbr.rel (%p233) target = $region32
        $region31: #{tpu_custom_call.1} parent=19 // pred_region
          %p236 = scmp.lt.s32.totalorder %s25, 1
          %s237 = scalar_select %p236, %s25, 1
          %s238 = scalar_lea.vmem %s2, %s237
        $region32: #{tpu_custom_call.1} parent=19 // pred_fallthru
          _
        // Predicated region
        $region33: #{tpu_custom_call.1} parent=19 // pred_check
          %p239 = pneg %p128
        $region34: #{tpu_custom_call.1} parent=19 // pred_check_branch
          %241 = sbr.rel (%p239) target = $region36
        $region35: #{tpu_custom_call.1} parent=19 // pred_region
          %p242 = scmp.lt.s32.totalorder %s26, 1
          %s243 = scalar_select %p242, %s26, 1
          %s244 = smul.addr %s243, 8
          %s245 = scalar_lea.vmem %s3, %s244
        $region36: #{tpu_custom_call.1} parent=19 // pred_fallthru
          _
      $region20: #{tpu_custom_call.1} parent=5 // pred_fallthru
        _
      %p246 = scmp.le.s32.totalorder 1, %s18
      %p247 = scmp.lt.s32.totalorder %s18, 5
      %p248 = pnand %p246, %p247
      %p249 = pneg %p248
      // Predicated region
      $region37: #{tpu_custom_call.1} parent=5 // pred_check
        _
      $region38: #{tpu_custom_call.1} parent=5 // pred_check_branch
        %251 = sbr.rel (%p248) target = $region40
      $region39: #{tpu_custom_call.1} parent=5 // pred_region
        %s252 = ssub.s32 %s18, 1
        %s253 = sand.u32 %s69, 1
        %s254 = scalar_lea.sflag [#allocation4], %s253
        %s255 = sand.u32 %s69, 1
        %s256 = smul.addr %s255, 128
        %s257 = scalar_lea.vmem [#allocation3], %s256
        // Predicated region
        $region41: #{tpu_custom_call.1} parent=39 // pred_check
          %p258 = pneg %p82
        $region42: #{tpu_custom_call.1} parent=39 // pred_check_branch
          %260 = sbr.rel (%p258) target = $region44
        $region43: #{tpu_custom_call.1} parent=39 // pred_region
          %261 = dma.done %s254, 2048
        $region44: #{tpu_custom_call.1} parent=39 // pred_fallthru
          _
        %p262 = scmp.lt.s32.totalorder %s28, 1
        %s263 = scalar_select %p262, %s28, 1
        %s264 = smul.addr %s263, 8
        %s265 = scalar_lea.vmem %s0, %s264
        %p266 = pneg %p56
        %p267 = pneg %p53
        %s268 = sand.u32 %s69, 1
        %s269 = scalar_lea.sflag [#allocation4], %s268
        %s270 = sand.u32 %s69, 1
        %s271 = smul.addr %s270, 128
        %s272 = scalar_lea.vmem [#allocation3], %s271
        %p273 = pneg %p82
        %p274 = pneg %p79
        %p275 = scmp.lt.s32.totalorder %s27, 1
        %s276 = scalar_select %p275, %s27, 1
        %s277 = scalar_lea.vmem %s2, %s276
        %p278 = pneg %p108
        %p279 = pneg %p105
        %p280 = scmp.lt.s32.totalorder %s28, 1
        %s281 = scalar_select %p280, %s28, 1
        %s282 = smul.addr %s281, 8
        %s283 = scalar_lea.vmem %s3, %s282
        %p284 = pneg %p134
        %p285 = pneg %p131
        %p286 = pneg %p155
        %p287 = pneg %p152
        %p288 = pneg %p183
        %p289 = pneg %p180
        %s290 = sand.u32 %s170, 1
        %s291 = scalar_lea.sflag [#allocation5], %s290
        %s292 = sand.u32 %s170, 1
        %s293 = smul.addr %s292, 8
        %s294 = scalar_lea.vmem [#allocation6], %s293
        %p295 = scmp.lt.s32.totalorder %s28, 1
        %s296 = scalar_select %p295, %s28, 1
        %s297 = smul.addr %s296, 8
        %s298 = scalar_lea.vmem %s0, %s297
        %s299 = smul.u32 16, %s27
        %p300 = scmp.lt.s32.totalorder %s27, 1
        %s301 = scalar_select %p300, %s27, 1
        %s302 = scalar_lea.vmem %s2, %s301
        %p303 = scmp.lt.s32.totalorder %s28, 1
        %s304 = scalar_select %p303, %s28, 1
        %s305 = smul.addr %s304, 8
        %s306 = scalar_lea.vmem %s3, %s305
        %v307 = vld [vmem:[%s298] sm:$0xff]
        %v308 = vmul.f32 %v307, %v307
        %309 = vadd.xlane.f32.xlu0 %v308
        %v310 = vpop.xlane.xlu0 %309
        %v311 = vrsqrt.pop %v310
        %v312 = vmul.f32 %v310, %v311
        %vm313 = vcmp.eq.f32.partialorder %v310, inf
        %v314 = vsel %vm313, %v310, %v312
        %vm315 = vcmp.eq.f32.partialorder %v310, 0.0
        %v316 = vand.u32 %v310, 2147483648
        %v317 = vsel %vm315, %v316, %v314
        %v318 = vmax.f32 %v317, 1e-12
        %v319 = vrcp.pop %v318
        %v320 = vmul.f32 1.0, %v319
        %v321 = vld [vmem:[%s257] sm:$0xff]
        %v322 = vld [vmem:[%s257 + $0x8] sm:$0xff]
        %v323 = vld [vmem:[%s257 + $0x10] sm:$0xff]
        %v324 = vld [vmem:[%s257 + $0x18] sm:$0xff]
        %v325 = vld [vmem:[%s257 + $0x20] sm:$0xff]
        %v326 = vld [vmem:[%s257 + $0x28] sm:$0xff]
        %v327 = vld [vmem:[%s257 + $0x30] sm:$0xff]
        %v328 = vld [vmem:[%s257 + $0x38] sm:$0xff]
        %v329 = vld [vmem:[%s257 + $0x40] sm:$0xff]
        %v330 = vld [vmem:[%s257 + $0x48] sm:$0xff]
        %v331 = vld [vmem:[%s257 + $0x50] sm:$0xff]
        %v332 = vld [vmem:[%s257 + $0x58] sm:$0xff]
        %v333 = vld [vmem:[%s257 + $0x60] sm:$0xff]
        %v334 = vld [vmem:[%s257 + $0x68] sm:$0xff]
        %v335 = vld [vmem:[%s257 + $0x70] sm:$0xff]
        %v336 = vld [vmem:[%s257 + $0x78] sm:$0xff]
        %337 = vmatprep.subr.mxu0 0.0
        %338 = vmatpush1.xpose.msra.mxu0 %v321
        %339 = vmatprep.subr.mxu0 0.0
        %340 = vmatpush1.xpose.msra.mxu0 %v322
        %341 = vmatprep.subr.mxu0 0.0
        %342 = vmatpush1.xpose.msra.mxu0 %v323
        %343 = vmatprep.subr.mxu0 0.0
        %344 = vmatpush1.xpose.msra.mxu0 %v324
        %345 = vmatprep.subr.mxu0 0.0
        %346 = vmatpush1.xpose.msra.mxu0 %v325
        %347 = vmatprep.subr.mxu0 0.0
        %348 = vmatpush1.xpose.msra.mxu0 %v326
        %349 = vmatprep.subr.mxu0 0.0
        %350 = vmatpush1.xpose.msra.mxu0 %v327
        %351 = vmatprep.subr.mxu0 0.0
        %352 = vmatpush1.xpose.msra.mxu0 %v328
        %353 = vmatprep.subr.mxu0 0.0
        %354 = vmatpush1.xpose.msra.mxu0 %v329
        %355 = vmatprep.subr.mxu0 0.0
        %356 = vmatpush1.xpose.msra.mxu0 %v330
        %357 = vmatprep.subr.mxu0 0.0
        %358 = vmatpush1.xpose.msra.mxu0 %v331
        %359 = vmatprep.subr.mxu0 0.0
        %360 = vmatpush1.xpose.msra.mxu0 %v332
        %361 = vmatprep.subr.mxu0 0.0
        %362 = vmatpush1.xpose.msra.mxu0 %v333
        %363 = vmatprep.subr.mxu0 0.0
        %364 = vmatpush1.xpose.msra.mxu0 %v334
        %365 = vmatprep.subr.mxu0 0.0
        %366 = vmatpush1.xpose.msra.mxu0 %v335
        %367 = vmatprep.subr.mxu0 0.0
        %368 = vmatpush1.xpose.msra.mxu0 %v336
        %369 = vmatprep.subr.mxu0 0.0
        %370 = vmatpush1.xpose.msra.mxu0 0.0
        %371 = vmatprep.subr.mxu0 0.0
        %372 = vmatpush1.xpose.msra.mxu0 0.0
        %373 = vmatprep.subr.mxu0 0.0
        %374 = vmatpush1.xpose.msra.mxu0 0.0
        %375 = vmatprep.subr.mxu0 0.0
        %376 = vmatpush1.xpose.msra.mxu0 0.0
        %377 = vmatprep.subr.mxu0 0.0
        %378 = vmatpush1.xpose.msra.mxu0 0.0
        %379 = vmatprep.subr.mxu0 0.0
        %380 = vmatpush1.xpose.msra.mxu0 0.0
        %381 = vmatprep.subr.mxu0 0.0
        %382 = vmatpush1.xpose.msra.mxu0 0.0
        %383 = vmatprep.subr.mxu0 0.0
        %384 = vmatpush1.xpose.msra.mxu0 0.0
        %385 = vmatprep.subr.mxu0 0.0
        %386 = vmatpush1.xpose.msra.mxu0 0.0
        %387 = vmatprep.subr.mxu0 0.0
        %388 = vmatpush1.xpose.msra.mxu0 0.0
        %389 = vmatprep.subr.mxu0 0.0
        %390 = vmatpush1.xpose.msra.mxu0 0.0
        %391 = vmatprep.subr.mxu0 0.0
        %392 = vmatpush1.xpose.msra.mxu0 0.0
        %393 = vmatprep.subr.mxu0 0.0
        %394 = vmatpush1.xpose.msra.mxu0 0.0
        %395 = vmatprep.subr.mxu0 0.0
        %396 = vmatpush1.xpose.msra.mxu0 0.0
        %397 = vmatprep.subr.mxu0 0.0
        %398 = vmatpush1.xpose.msra.mxu0 0.0
        %399 = vmatprep.subr.mxu0 0.0
        %400 = vmatpush1.xpose.msra.mxu0 0.0
        %401 = vmatprep.mubr.f32.mxu0 0.0
        %402 = vmatmul.mubr.f32.gmra.mrb[0].mxu0 %v307
        %v403 = vpop.f32.mrb[0].mxu0
        %v404 = vadd.f32 0.0, %v403
        %v405 = vpop.f32.mrb[0].mxu0
        %406 = vdwg.mxu0
        %v407 = vmul.f32 %v404, %v320
        %v408 = vld [vmem:[%s302] sm:$0x1]
        %v410 = vlaneseq
        %v411 = vshrl.u32 %v410, 7
        %v412 = vsub.s32 0, %v411
        %v413 = vrot.slane %v408, %v412
        %v415 = vmul.f32 %v407, %v413
        %v416 = vmax.f32 %v415, -1.0
        %v417 = vmin.f32 %v416, 1.0
        %v418 = vld [vmem:[%s306] sm:$0xff]
        %s419 = smul.u32 %s27, 128
        %v420 = vstv %s419
        %v421 = vsub.s32 %v418, %v420
        %v422 = vlaneseq
        %v423 = vand.u32 %v422, 127
        %424 = vset.pattern.permute.xlu0 0
        %425 = vperm.xlu0 %424, %v421
        %v426 = vpop.permute.xlu0 %425
        %vm427 = vcmp.eq.s32.totalorder %v423, %v426
        %v428 = vsel %vm427, %v417, 0.0
        %429 = vadd.xlane.f32.xlu0 %v428
        %v430 = vpop.xlane.xlu0 %429
        %v431 = vmul.f32 %v430, %v430
        %v432 = vmul.f32 %v431, 8.0
        %v433 = vmul.f32 %v432, %v431
        %v434 = vsub.f32 %v433, %v432
        %v435 = vadd.f32 %v434, 1.0
        %vm436 = vcmp.le.f32.partialorder %v430, 0.70710677
        %v437 = vsel %vm436, 1.0, 0.0
        %v438 = vadd.f32 %v437, 0.0
        %vm439 = vcmp.le.f32.partialorder %v430, 1.7948966e-09
        %v440 = vsel %vm439, 1.0, 0.0
        %v441 = vadd.f32 %v438, %v440
        %vm442 = vcmp.le.f32.partialorder %v430, -0.70710677
        %v443 = vsel %vm442, 1.0, 0.0
        %v444 = vadd.f32 %v441, %v443
        %vm445 = vcmp.le.f32.partialorder %v430, -1.0
        %v446 = vsel %vm445, 1.0, 0.0
        %v447 = vadd.f32 %v444, %v446
        %v448 = vand.u32 2147483647, %v447
        %v449 = vrcp.pop 2.0
        %v450 = vmul.f32 %v448, %v449
        %v451 = vfloor.f32 %v450
        %v452 = vmul.f32 %v451, 2.0
        %v453 = vsub.f32 %v448, %v452
        %vm454 = vcmp.eq.f32.partialorder %v453, 2.0
        %v455 = vsel %vm454, 0.0, %v453
        %v456 = vand.u32 2147483647, %v455
        %v457 = vand.u32 %v447, 2147483648
        %v458 = vor.u32 %v456, %v457
        %vm459 = vcmp.ne.f32.partialorder %v458, 0.0
        %vm460 = vcmp.lt.f32.partialorder %v458, 0.0
        %vm461 = vmand %vm460, %vm459
        %v462 = vadd.f32 %v458, 2.0
        %v463 = vsel %vm461, %v462, %v458
        %v464 = vmul.f32 %v463, 2.0
        %v465 = vsub.f32 1.0, %v464
        %v466 = vmul.f32 %v465, %v435
        %v467 = vmul.f32 %v447, 2.0
        %v468 = vsub.f32 %v466, %v467
        %v469 = vsub.f32 %v468, %v430
        %s470 = sld [smem:[#allocation2]]
        %v471 = vstv %s470
        %v472 = vmul.f32 %v469, %v471
        %v473 = vsel %vm427, %v472, 0.0
        %v474 = vadd.f32 %v417, %v473
        %v475 = vmul.f32 %v474, %v317
        %476 = vst [vmem:[%s294] sm:$0xff] %v475
        %s477 = sand.u32 %s170, 1
        %s478 = scalar_lea.sflag [#allocation5], %s477
        %s479 = sand.u32 %s170, 1
        %s480 = smul.addr %s479, 8
        %s481 = scalar_lea.vmem [#allocation6], %s480
        // Predicated region
        $region45: #{tpu_custom_call.1} parent=39 // pred_check
          %p482 = pneg %p180
        $region46: #{tpu_custom_call.1} parent=39 // pred_check_branch
          %484 = sbr.rel (%p482) target = $region48
        $region47: #{tpu_custom_call.1} parent=39 // pred_region
          %s486 = ssub.s32 128, 128
          %487 = vsyncadd %s478, %s486
          %s488 = smul.addr %s28, 2
          %s489 = sadd.s32 %s27, %s488
          %s490 = smul.addr %s489, 128
          %s491 = scalar_lea.hbm %s5, %s490
          %s493 = sshll.u32 %s481, 4
          %s494 = int_to_ptr.vmem [resolvable:$true] %s493
          %496 = dma.vmem_to_hbm [thread:$0]  %s494, 128, %s491, %s478
        $region48: #{tpu_custom_call.1} parent=39 // pred_fallthru
          _
      $region40: #{tpu_custom_call.1} parent=5 // pred_fallthru
        _
      %p497 = scmp.le.s32.totalorder 2, %s18
      // Predicated region
      $region49: #{tpu_custom_call.1} parent=5 // pred_check
        %p498 = pneg %p497
      $region50: #{tpu_custom_call.1} parent=5 // pred_check_branch
        %500 = sbr.rel (%p498) target = $region52
      $region51: #{tpu_custom_call.1} parent=5 // pred_region
        %s501 = ssub.s32 %s18, 2
        // Predicated region
        $region53: #{tpu_custom_call.1} parent=51 // pred_check
          %p502 = pneg %p186
        $region54: #{tpu_custom_call.1} parent=51 // pred_check_branch
          %504 = sbr.rel (%p502) target = $region56
        $region55: #{tpu_custom_call.1} parent=51 // pred_region
          %s505 = sand.u32 %s171, 1
          %s506 = scalar_lea.sflag [#allocation5], %s505
          %s507 = sand.u32 %s171, 1
          %s508 = smul.addr %s507, 8
          %s509 = scalar_lea.vmem [#allocation6], %s508
          %510 = dma.done %s506, 128
        $region56: #{tpu_custom_call.1} parent=51 // pred_fallthru
          _
      $region52: #{tpu_custom_call.1} parent=5 // pred_fallthru
        _
    $region6: #{tpu_custom_call.1} parent=1 // loop_footer
      %s22 = sadd.s32 1, %s18
    $region7: #{tpu_custom_call.1} parent=1 // loop_footer_branch
      %17 = sbr.rel target = $region3
    $region8: #{tpu_custom_call.1} parent=1 // loop_exit
      _
    %511 = vsyncpa [#allocation4], 1
    %s512 = scalar_lea.sflag [#allocation4], 1
    %513 = vsyncpa %s512, 1
    %514 = vsyncpa [#allocation5], 1
    %s515 = scalar_lea.sflag [#allocation5], 1
    %516 = vsyncpa %s515, 1

</llo_original>
